<compile_context>
chip_gen: v7x
topology: tpu7x:2x2x1
jax: 0.10.0
libtpu: 0.0.40
codegen_flags: <defaults>
</compile_context>

<pallas_src>
import math
from functools import partial

import jax
import jax.numpy as jnp
import numpy as np
from jax.experimental import pallas as pl
from jax.experimental.pallas import tpu as pltpu


def mh_rule_layer_kernel(x_ref, pos_ref, w_ref, b_ref, hmask_ref, wo_ref,
                         bo_ref, r_ref, p_ref, *, n_head, n_rules):
    """One batch block per grid step.

    x_ref    : (TB, NF, E)     input block (compute dtype)
    pos_ref  : (NF, E)         positional encoding (compute dtype)
    w_ref    : (E, E + H*R)    [Wv.T | (Wk.T @ qbig) * scale]  (compute dtype)
    b_ref    : (1, E + H*R)    [bv   | (bk   @ qbig) * scale]  float32
    hmask_ref: (H, 1, E)       block-diagonal head mask, float32
    wo_ref   : (E, E)          Wout.T (compute dtype)
    bo_ref   : (1, E)          bout, float32
    r_ref    : (TB, R, E)      output r
    p_ref    : (TB, NF, H*R)   attention probabilities (natural lane-dense layout)
    """
    tb, nf, e = x_ref.shape
    cd = x_ref.dtype                                     # compute dtype
    hr = n_head * n_rules

    # positional encoding + flatten the batch block for the fused projection
    x = x_ref[...] + pos_ref[...]                        # (TB, NF, E)
    xf = x.reshape(tb * nf, e)

    # ONE fused MXU pass: V projection and (Wk-folded, pre-scaled) logits
    va = jnp.dot(xf, w_ref[...],
                 preferred_element_type=jnp.float32) + b_ref[...]   # (TB*NF, E+H*R)
    v = va[:, :e]                                        # (TB*NF, E)    f32
    a = va[:, e:]                                        # (TB*NF, H*R)  f32 (scaled)

    # softmax over the feature (sublane) axis in the natural layout; the store
    # is lane-dense in H*R (no in-kernel swapaxes needed for the store).
    a3 = a.reshape(tb, nf, hr)
    a3 = a3 - jnp.max(a3, axis=1, keepdims=True)
    pexp = jnp.exp(a3)                                   # f32
    denom = jnp.sum(pexp, axis=1, keepdims=True)
    p = pexp * pl.reciprocal(denom, approx=True)         # EUP vrcp, free slot
    p_ref[...] = p.astype(p_ref.dtype)

    # heads: one lane-dense batched matmul p^T @ v (N = E), then a cheap
    # block-diagonal head extraction (mask * sum) instead of H tiny N=hd
    # matmuls + concatenate.
    pT = jnp.swapaxes(p, 1, 2).astype(cd)                # (TB, H*R, NF)
    v3 = v.reshape(tb, nf, e).astype(cd)                 # (TB, NF, E)
    full = jnp.einsum('brn,bne->bre', pT, v3,
                      preferred_element_type=jnp.float32)            # (TB, H*R, E)
    full = full.reshape(tb, n_head, n_rules, e)          # (TB, H, R, E)
    r2 = jnp.sum(full * hmask_ref[...], axis=1)          # (TB, R, E)   f32

    # output projection: one 2D matmul with pre-transposed Wout
    rf = r2.reshape(tb * n_rules, e).astype(cd)
    out = jnp.dot(rf, wo_ref[...],
                  preferred_element_type=jnp.float32) + bo_ref[...]  # (TB*R, E)
    r_ref[...] = out.reshape(tb, n_rules, e).astype(r_ref.dtype)


def _device_kind():
    try:
        return jax.devices()[0].device_kind.lower()
    except Exception:
        return ""


def _auto_tiling():
    kind = _device_kind()
    if "v7" in kind:
        # 64 MiB VMEM / 2 TensorCores: modest tiles, keep >= 2 parallel steps.
        return dict(target_rows=256, min_grid_steps=2)
    if "v5 lite" in kind or "v5e" in kind or "v5litepod" in kind:
        # 128-wide MXU, lowest HBM bandwidth: 128-row-multiple tiles.
        return dict(target_rows=256, min_grid_steps=1)
    # v6e and default: 128 MiB VMEM, single TC -> few fat steps.
    return dict(target_rows=1024, min_grid_steps=1)


def _pick_batch_tile(b, nf, target_rows, min_grid_steps):
    tb = max(1, min(b, target_rows // max(nf, 1)))
    if min_grid_steps > 1 and b >= min_grid_steps:
        tb = min(tb, b // min_grid_steps)        # >= 2 grid steps for 2 TCs (v7x)
    while b % tb:                                # tile must divide the batch
        tb -= 1
    return max(tb, 1)


def _vmem_limit_bytes(tb, nf, e, hr, n_rules, n_head, c_item):
    f32 = 4
    weights = (nf * e + e * (e + hr) + e * e) * c_item \
        + ((e + hr) + e + n_head * e) * f32
    blk_io = (tb * nf * e) * c_item + (tb * n_rules * e + tb * nf * hr) * f32
    inter = (tb * nf * (e + hr) + 3 * tb * nf * hr + tb * hr * e
             + 2 * tb * n_rules * e) * f32
    budget = 2 * (weights + blk_io) + 2 * inter  # double-buffering + slack
    return int(min(64 * 2 ** 20, max(32 * 2 ** 20, budget)))


def mh_rule_layer_forward(x, wk, bk, wv, bv, wo, bo, query, pos_enc, n_head,
                          tau=1.0, compute_dtype=None, prob_dtype=jnp.float32,
                          batch_tile=None):
    b, nf, e_in = x.shape
    n_rules, e = query.shape
    assert e_in == e, "MHRuleLayer requires e_dim_in == e_dim_out"
    assert e % n_head == 0, "e_dim_out must be divisible by n_head"
    hd = e // n_head
    hr = n_head * n_rules
    scale = 1.0 / (math.sqrt(hd) * tau)

    if compute_dtype is None:
        # bf16 MXU inputs with f32 accumulation/softmax is the default on all
        # current TPU generations (largest win on v5e).
        compute_dtype = jnp.bfloat16
    cd = jnp.dtype(compute_dtype)

    # ---- one-time parameter preparation (plain XLA, outside the kernel) ----
    pos = pos_enc[:nf].astype(jnp.float32)
    # block-diagonal "big query": qbig[e', h*R + r] = query[r, e'] * (e'//hd == h)
    head_of_e = jnp.arange(e) // hd
    head_sel = (head_of_e[:, None] == jnp.arange(n_head)[None, :]
                ).astype(jnp.float32)                                   # (E, H)
    qbig = (query.astype(jnp.float32).T[:, None, :]
            * head_sel[:, :, None]).reshape(e, hr)                      # (E, H*R)
    # fold Wk, bk and the 1/(sqrt(hd)*tau) scale into the logits weight/bias
    w_a = (wk.astype(jnp.float32).T @ qbig) * scale                     # (E, H*R)
    b_a = (bk.astype(jnp.float32) @ qbig) * scale                       # (H*R,)
    # fuse V projection + logits into one matmul weight [Wv.T | W_a]
    w_fused = jnp.concatenate([wv.astype(jnp.float32).T, w_a], axis=1)  # (E, E+H*R)
    b_fused = jnp.concatenate([bv.astype(jnp.float32), b_a]).reshape(1, e + hr)
    # block-diagonal head-extraction mask for the attention-weighted values
    hmask = head_sel.T.reshape(n_head, 1, e)                            # (H, 1, E)
    wo_t = wo.astype(jnp.float32).T                                     # (E, E)
    bo2 = bo.reshape(1, e).astype(jnp.float32)

    x_c = x.astype(cd)
    pos_c = pos.astype(cd)
    w_c = w_fused.astype(cd)
    wo_c = wo_t.astype(cd)

    if batch_tile is None:
        tb = _pick_batch_tile(b, nf, **_auto_tiling())
    else:
        tb = int(batch_tile)
        assert b % tb == 0, "batch_tile must divide the batch size"
    grid = (b // tb,)

    kernel = partial(mh_rule_layer_kernel, n_head=n_head, n_rules=n_rules)

    r, p = pl.pallas_call(
        kernel,
        out_shape=(
            jax.ShapeDtypeStruct((b, n_rules, e), jnp.float32),
            jax.ShapeDtypeStruct((b, nf, hr), jnp.dtype(prob_dtype)),
        ),
        grid_spec=pltpu.PrefetchScalarGridSpec(
            num_scalar_prefetch=0,
            grid=grid,
            in_specs=[
                pl.BlockSpec((tb, nf, e), lambda i: (i, 0, 0)),      # x block
                pl.BlockSpec((nf, e), lambda i: (0, 0)),             # pos
                pl.BlockSpec((e, e + hr), lambda i: (0, 0)),         # [Wv.T | W_a]
                pl.BlockSpec((1, e + hr), lambda i: (0, 0)),         # [bv | b_a]
                pl.BlockSpec((n_head, 1, e), lambda i: (0, 0, 0)),   # head mask
                pl.BlockSpec((e, e), lambda i: (0, 0)),              # Wout.T
                pl.BlockSpec((1, e), lambda i: (0, 0)),              # bout
            ],
            out_specs=[
                pl.BlockSpec((tb, n_rules, e), lambda i: (i, 0, 0)),
                pl.BlockSpec((tb, nf, hr), lambda i: (i, 0, 0)),
            ],
        ),
        compiler_params=pltpu.CompilerParams(
            dimension_semantics=("parallel",),
            vmem_limit_bytes=_vmem_limit_bytes(tb, nf, e, hr, n_rules, n_head,
                                               cd.itemsize),
        ),
    )(x_c, pos_c, w_c, b_fused, hmask, wo_c, bo2)

    # layout plumbing only: (B, NF, H*R) -> (B, H, R, NF)
    a_prob = p.reshape(b, nf, n_head, n_rules).transpose(0, 2, 3, 1)
    return r, a_prob


def mh_rule_layer_reference(x, wk, bk, wv, bv, wo, bo, query, pos_enc, n_head,
                            tau=1.0):
    """Pure-JAX reference mirroring the PyTorch MHRuleLayer.forward."""
    b, nf, e = x.shape
    n_rules = query.shape[0]
    hd = e // n_head
    x = x + pos_enc[None, :nf, :]
    k = jnp.einsum('bne,oe->bno', x, wk) + bk
    v = jnp.einsum('bne,oe->bno', x, wv) + bv
    k = k.reshape(b, nf, n_head, hd).transpose(0, 2, 1, 3)     # (b,H,nf,hd)
    v = v.reshape(b, nf, n_head, hd).transpose(0, 2, 1, 3)
    q = query.reshape(n_rules, n_head, hd).transpose(1, 0, 2)  # (H,R,hd)
    a = jnp.einsum('bhnd,hrd->bhnr', k, q) / math.sqrt(hd)
    a_prob = jax.nn.softmax(a / tau, axis=2)                   # softmax over nf
    a_prob = jnp.transpose(a_prob, (0, 1, 3, 2))               # (b,H,R,nf)
    r = jnp.einsum('bhrn,bhnd->bhrd', a_prob, v)
    r = jnp.transpose(r, (0, 2, 1, 3)).reshape(b, n_rules, e)
    r = jnp.einsum('bre,oe->bro', r, wo) + bo
    return r, a_prob


def _kaiming_uniform(key, shape, fan_in):
    # kaiming_uniform_ with a=sqrt(5): bound = 1/sqrt(fan_in)
    bound = 1.0 / math.sqrt(fan_in)
    return jax.random.uniform(key, shape, minval=-bound, maxval=bound,
                              dtype=jnp.float32)


if __name__ == "__main__":
    # b=2, n_features=8, e_dim_out=32, n_rules=4, n_head=8 (head_dim=4)
    B, NF, E, R, H = 2, 8, 32, 4, 8
    TAU = 1.0

    root = jax.random.PRNGKey(0)
    ks = jax.random.split(root, 10)

    x = jax.random.normal(ks[0], (B, NF, E), dtype=jnp.float32)
    query = _kaiming_uniform(ks[1], (R, E), fan_in=E)      # (n_rules, e_dim_out)
    pos_enc = _kaiming_uniform(ks[2], (NF, E), fan_in=E)   # (n_features, e_dim_out)
    wk = _kaiming_uniform(ks[3], (E, E), fan_in=E)
    bk = _kaiming_uniform(ks[4], (E,), fan_in=E)
    wv = _kaiming_uniform(ks[5], (E, E), fan_in=E)
    bv = _kaiming_uniform(ks[6], (E,), fan_in=E)
    wo = _kaiming_uniform(ks[7], (E, E), fan_in=E)
    bo = _kaiming_uniform(ks[8], (E,), fan_in=E)

    r_ref, a_ref = mh_rule_layer_reference(x, wk, bk, wv, bv, wo, bo, query,
                                           pos_enc, n_head=H, tau=TAU)

    # float32 path (tolerance loosened slightly for the EUP approx reciprocal)
    r, a_prob = mh_rule_layer_forward(x, wk, bk, wv, bv, wo, bo, query, pos_enc,
                                      n_head=H, tau=TAU,
                                      compute_dtype=jnp.float32)
    (r, a_prob) = jax.block_until_ready((r, a_prob))
    assert r.shape == (B, R, E) and a_prob.shape == (B, H, R, NF)
    np.testing.assert_allclose(np.asarray(r), np.asarray(r_ref),
                               rtol=5e-3, atol=5e-3)
    np.testing.assert_allclose(np.asarray(a_prob), np.asarray(a_ref),
                               rtol=5e-3, atol=5e-3)

    # bfloat16 compute path (MXU bf16 inputs, f32 accumulation and f32 softmax)
    r16, a16 = mh_rule_layer_forward(x, wk, bk, wv, bv, wo, bo, query, pos_enc,
                                     n_head=H, tau=TAU,
                                     compute_dtype=jnp.bfloat16)
    (r16, a16) = jax.block_until_ready((r16, a16))
    np.testing.assert_allclose(np.asarray(r16), np.asarray(r_ref),
                               rtol=5e-2, atol=5e-2)
    np.testing.assert_allclose(np.asarray(a16), np.asarray(a_ref),
                               rtol=5e-2, atol=5e-2)

    print("KERNEL_OK")
</pallas_src>

<mosaic_0001>
module attributes {stable_mosaic.version = 11 : i64} {
  func.func @mh_rule_layer_kernel(%arg0: i32, %arg1: memref<2x8x32xf32, #tpu.memory_space<vmem>>, %arg2: memref<8x32xf32, #tpu.memory_space<vmem>>, %arg3: memref<32x64xf32, #tpu.memory_space<vmem>>, %arg4: memref<1x64xf32, #tpu.memory_space<vmem>>, %arg5: memref<8x1x32xf32, #tpu.memory_space<vmem>>, %arg6: memref<32x32xf32, #tpu.memory_space<vmem>>, %arg7: memref<1x32xf32, #tpu.memory_space<vmem>>, %arg8: memref<2x4x32xf32, #tpu.memory_space<vmem>>, %arg9: memref<2x8x32xf32, #tpu.memory_space<vmem>>) attributes {dimension_semantics = [#tpu.dimension_semantics<parallel>], iteration_bounds = array<i64: 1>, scalar_prefetch = 0 : i64, scratch_operands = 0 : i64, tpu.core_type = #tpu.core_type<tc>, window_params = [{transform_indices = @transform_0, window_bounds = array<i64: 2, 8, 32>}, {pipeline_mode = #tpu.pipeline_mode<synchronous>, transform_indices = @transform_1, window_bounds = array<i64: 8, 32>}, {pipeline_mode = #tpu.pipeline_mode<synchronous>, transform_indices = @transform_2, window_bounds = array<i64: 32, 64>}, {pipeline_mode = #tpu.pipeline_mode<synchronous>, transform_indices = @transform_3, window_bounds = array<i64: 1, 64>}, {pipeline_mode = #tpu.pipeline_mode<synchronous>, transform_indices = @transform_4, window_bounds = array<i64: 8, 1, 32>}, {pipeline_mode = #tpu.pipeline_mode<synchronous>, transform_indices = @transform_5, window_bounds = array<i64: 32, 32>}, {pipeline_mode = #tpu.pipeline_mode<synchronous>, transform_indices = @transform_6, window_bounds = array<i64: 1, 32>}, {transform_indices = @transform_7, window_bounds = array<i64: 2, 4, 32>}, {transform_indices = @transform_8, window_bounds = array<i64: 2, 8, 32>}]} {
    %c0 = arith.constant 0 : index
    %c0_0 = arith.constant 0 : index
    %c0_1 = arith.constant 0 : index
    %0 = vector.load %arg1[%c0, %c0_0, %c0_1] : memref<2x8x32xf32, #tpu.memory_space<vmem>>, vector<2x8x32xf32>
    %c0_2 = arith.constant 0 : index
    %c0_3 = arith.constant 0 : index
    %1 = vector.load %arg2[%c0_2, %c0_3] : memref<8x32xf32, #tpu.memory_space<vmem>>, vector<8x32xf32>
    %2 = vector.shape_cast %1 : vector<8x32xf32> to vector<1x8x32xf32>
    %3 = vector.broadcast %2 : vector<1x8x32xf32> to vector<2x8x32xf32>
    %4 = arith.addf %0, %3 : vector<2x8x32xf32>
    %5 = vector.shape_cast %4 : vector<2x8x32xf32> to vector<16x32xf32>
    %c0_4 = arith.constant 0 : index
    %c0_5 = arith.constant 0 : index
    %6 = vector.load %arg3[%c0_4, %c0_5] : memref<32x64xf32, #tpu.memory_space<vmem>>, vector<32x64xf32>
    %cst = arith.constant dense<0.000000e+00> : vector<16x64xf32>
    %7 = tpu.matmul %5, %6, %cst {dimension_numbers = #tpu.dot_dimension_numbers<[1], [0], [0], [1], [0, 0, 1, 1], [], []>} : vector<16x32xf32>, vector<32x64xf32>, vector<16x64xf32> -> vector<16x64xf32>
    %c0_6 = arith.constant 0 : index
    %c0_7 = arith.constant 0 : index
    %8 = vector.load %arg4[%c0_6, %c0_7] : memref<1x64xf32, #tpu.memory_space<vmem>>, vector<1x64xf32>
    %9 = vector.broadcast %8 : vector<1x64xf32> to vector<16x64xf32>
    %10 = arith.addf %7, %9 : vector<16x64xf32>
    %11 = vector.extract_strided_slice %10 {offsets = [0, 0], sizes = [16, 32], strides = [1, 1]} : vector<16x64xf32> to vector<16x32xf32>
    %12 = vector.extract_strided_slice %10 {offsets = [0, 32], sizes = [16, 32], strides = [1, 1]} : vector<16x64xf32> to vector<16x32xf32>
    %13 = vector.shape_cast %12 : vector<16x32xf32> to vector<2x8x32xf32>
    %cst_8 = arith.constant dense<0xFF800000> : vector<2x32xf32>
    %14 = vector.multi_reduction <maximumf>, %13, %cst_8 [1] : vector<2x8x32xf32> to vector<2x32xf32>
    %15 = vector.shape_cast %14 : vector<2x32xf32> to vector<2x1x32xf32>
    %16 = vector.broadcast %15 : vector<2x1x32xf32> to vector<2x8x32xf32>
    %17 = arith.subf %13, %16 : vector<2x8x32xf32>
    %18 = math.exp %17 : vector<2x8x32xf32>
    %cst_9 = arith.constant dense<0.000000e+00> : vector<2x32xf32>
    %19 = vector.multi_reduction <add>, %18, %cst_9 [1] : vector<2x8x32xf32> to vector<2x32xf32>
    %20 = vector.shape_cast %19 : vector<2x32xf32> to vector<2x1x32xf32>
    %21 = tpu.reciprocal %20 {approx = true} : vector<2x1x32xf32> -> vector<2x1x32xf32>
    %22 = vector.broadcast %21 : vector<2x1x32xf32> to vector<2x8x32xf32>
    %23 = arith.mulf %18, %22 : vector<2x8x32xf32>
    %c0_10 = arith.constant 0 : index
    %c0_11 = arith.constant 0 : index
    %c0_12 = arith.constant 0 : index
    %24 = vector.load %arg9[%c0_10, %c0_11, %c0_12] : memref<2x8x32xf32, #tpu.memory_space<vmem>>, vector<2x8x32xf32>
    tpu.vector_store %arg9[%c0_10, %c0_11, %c0_12], %23 {strides = array<i32>} : memref<2x8x32xf32, #tpu.memory_space<vmem>>, vector<2x8x32xf32>,
    %25 = tpu.transpose %23, [0, 2, 1] : vector<2x8x32xf32> -> vector<2x32x8xf32>
    %26 = vector.shape_cast %11 : vector<16x32xf32> to vector<2x8x32xf32>
    "tpu.trace_start"() <{level = 10 : i32, message = "brn,bne->bre"}> : () -> ()
    %cst_13 = arith.constant dense<0.000000e+00> : vector<2x32x32xf32>
    %27 = tpu.matmul %25, %26, %cst_13 {dimension_numbers = #tpu.dot_dimension_numbers<[2], [1], [1], [2], [0, 0, 0, 1, 1, 2], [0], [0]>} : vector<2x32x8xf32>, vector<2x8x32xf32>, vector<2x32x32xf32> -> vector<2x32x32xf32>
    "tpu.trace_stop"() : () -> ()
    %28 = vector.shape_cast %27 : vector<2x32x32xf32> to vector<2x8x4x32xf32>
    %c0_14 = arith.constant 0 : index
    %c0_15 = arith.constant 0 : index
    %c0_16 = arith.constant 0 : index
    %29 = vector.load %arg5[%c0_14, %c0_15, %c0_16] : memref<8x1x32xf32, #tpu.memory_space<vmem>>, vector<8x1x32xf32>
    %30 = vector.shape_cast %29 : vector<8x1x32xf32> to vector<1x8x1x32xf32>
    %31 = vector.broadcast %30 : vector<1x8x1x32xf32> to vector<2x8x4x32xf32>
    %32 = arith.mulf %28, %31 : vector<2x8x4x32xf32>
    %cst_17 = arith.constant dense<0.000000e+00> : vector<2x4x32xf32>
    %33 = vector.multi_reduction <add>, %32, %cst_17 [1] : vector<2x8x4x32xf32> to vector<2x4x32xf32>
    %34 = vector.shape_cast %33 : vector<2x4x32xf32> to vector<8x32xf32>
    %c0_18 = arith.constant 0 : index
    %c0_19 = arith.constant 0 : index
    %35 = vector.load %arg6[%c0_18, %c0_19] : memref<32x32xf32, #tpu.memory_space<vmem>>, vector<32x32xf32>
    %cst_20 = arith.constant dense<0.000000e+00> : vector<8x32xf32>
    %36 = tpu.matmul %34, %35, %cst_20 {dimension_numbers = #tpu.dot_dimension_numbers<[1], [0], [0], [1], [0, 0, 1, 1], [], []>} : vector<8x32xf32>, vector<32x32xf32>, vector<8x32xf32> -> vector<8x32xf32>
    %c0_21 = arith.constant 0 : index
    %c0_22 = arith.constant 0 : index
    %37 = vector.load %arg7[%c0_21, %c0_22] : memref<1x32xf32, #tpu.memory_space<vmem>>, vector<1x32xf32>
    %38 = vector.broadcast %37 : vector<1x32xf32> to vector<8x32xf32>
    %39 = arith.addf %36, %38 : vector<8x32xf32>
    %40 = vector.shape_cast %39 : vector<8x32xf32> to vector<2x4x32xf32>
    %c0_23 = arith.constant 0 : index
    %c0_24 = arith.constant 0 : index
    %c0_25 = arith.constant 0 : index
    %41 = vector.load %arg8[%c0_23, %c0_24, %c0_25] : memref<2x4x32xf32, #tpu.memory_space<vmem>>, vector<2x4x32xf32>
    tpu.vector_store %arg8[%c0_23, %c0_24, %c0_25], %40 {strides = array<i32>} : memref<2x4x32xf32, #tpu.memory_space<vmem>>, vector<2x4x32xf32>,
    return
  }
  func.func @transform_0(%arg0: i32) -> (i32, i32, i32) {
    %c0_i32 = arith.constant 0 : i32
    %c0_i32_0 = arith.constant 0 : i32
    %c0_i32_1 = arith.constant 0 : i32
    return %arg0, %c0_i32, %c0_i32_0 : i32, i32, i32
  }
  func.func @transform_1(%arg0: i32) -> (i32, i32) {
    %c0_i32 = arith.constant 0 : i32
    %c0_i32_0 = arith.constant 0 : i32
    %c0_i32_1 = arith.constant 0 : i32
    return %c0_i32, %c0_i32_0 : i32, i32
  }
  func.func @transform_2(%arg0: i32) -> (i32, i32) {
    %c0_i32 = arith.constant 0 : i32
    %c0_i32_0 = arith.constant 0 : i32
    %c0_i32_1 = arith.constant 0 : i32
    return %c0_i32, %c0_i32_0 : i32, i32
  }
  func.func @transform_3(%arg0: i32) -> (i32, i32) {
    %c0_i32 = arith.constant 0 : i32
    %c0_i32_0 = arith.constant 0 : i32
    %c0_i32_1 = arith.constant 0 : i32
    return %c0_i32, %c0_i32_0 : i32, i32
  }
  func.func @transform_4(%arg0: i32) -> (i32, i32, i32) {
    %c0_i32 = arith.constant 0 : i32
    %c0_i32_0 = arith.constant 0 : i32
    %c0_i32_1 = arith.constant 0 : i32
    %c0_i32_2 = arith.constant 0 : i32
    return %c0_i32, %c0_i32_0, %c0_i32_1 : i32, i32, i32
  }
  func.func @transform_5(%arg0: i32) -> (i32, i32) {
    %c0_i32 = arith.constant 0 : i32
    %c0_i32_0 = arith.constant 0 : i32
    %c0_i32_1 = arith.constant 0 : i32
    return %c0_i32, %c0_i32_0 : i32, i32
  }
  func.func @transform_6(%arg0: i32) -> (i32, i32) {
    %c0_i32 = arith.constant 0 : i32
    %c0_i32_0 = arith.constant 0 : i32
    %c0_i32_1 = arith.constant 0 : i32
    return %c0_i32, %c0_i32_0 : i32, i32
  }
  func.func @transform_7(%arg0: i32) -> (i32, i32, i32) {
    %c0_i32 = arith.constant 0 : i32
    %c0_i32_0 = arith.constant 0 : i32
    %c0_i32_1 = arith.constant 0 : i32
    return %arg0, %c0_i32, %c0_i32_0 : i32, i32, i32
  }
  func.func @transform_8(%arg0: i32) -> (i32, i32, i32) {
    %c0_i32 = arith.constant 0 : i32
    %c0_i32_0 = arith.constant 0 : i32
    %c0_i32_1 = arith.constant 0 : i32
    return %arg0, %c0_i32, %c0_i32_0 : i32, i32, i32
  }
}

</mosaic_0001>

<llo_original>
// kernel: tpu_custom_call.1
$region0: #{tpu_custom_call.1}
  #allocation0 [shape = 'u32[]', space=smem, size = 0x4, offset = 0x4, fixed_abs, tag = 'smem constant byte address 0x4 - core index']
  #allocation1 [shape = 'u32[144,128]{1,0:T(1,128)}', space=vmem, size = 0x12000, scoped, tag = 'internal scratch']
  %s0 = inlined_call_operand.hbm [shape: f32[2,8,32], index: 0, kind: input, shape index: {}]
  %s1 = inlined_call_operand.hbm [shape: f32[8,32], index: 1, kind: input, shape index: {}]
  %s2 = inlined_call_operand.hbm [shape: f32[32,64], index: 2, kind: input, shape index: {}]
  %s3 = inlined_call_operand.vmem [shape: f32[1,64], index: 3, kind: input, shape index: {}]
  %s4 = inlined_call_operand.vmem [shape: f32[8,1,32], index: 4, kind: input, shape index: {}]
  %s5 = inlined_call_operand.hbm [shape: f32[32,32], index: 5, kind: input, shape index: {}]
  %s6 = inlined_call_operand.vmem [shape: f32[1,32], index: 6, kind: input, shape index: {}]
  %s7 = inlined_call_operand.hbm [shape: f32[2,4,32], index: 7, kind: output, shape index: {0}]
  %s8 = inlined_call_operand.hbm [shape: f32[2,8,32], index: 8, kind: output, shape index: {1}]
  %9 = xla_tuple %s7, %s8
  %s10 = sld [smem:[#allocation0]]
  $region62: #{tpu_custom_call.1} parent=0
    _
  %s12 = ssub.s32 1, %s10
  %s13 = scalar_select 0, %s12, %s10
  $region1: #{tpu_custom_call.1} parent=0
    #allocation2 [shape = 'u8[8192]{0}', space=vmem, size = 0x2000, scoped, tag = 'input window, operand 0, single buffered']
    #allocation3 [shape = 's32[1]{0}', space=sflag, size = 0x4, scoped, tag = 'scoped memory for tpu_custom_call.1']
    #allocation4 [shape = 's32[1]{0}', space=sflag, size = 0x4, scoped, tag = 'scoped memory for tpu_custom_call.1']
    #allocation5 [shape = 'u8[4096]{0}', space=vmem, size = 0x1000, scoped, tag = 'input window, operand 1, single buffered']
    #allocation6 [shape = 's32[1]{0}', space=sflag, size = 0x4, scoped, tag = 'scoped memory for tpu_custom_call.1']
    #allocation7 [shape = 'u8[16384]{0}', space=vmem, size = 0x4000, scoped, tag = 'input window, operand 2, single buffered']
    #allocation8 [shape = 'u8[16384]{0}', space=vmem, size = 0x4000, scoped, tag = 'input window, operand 5, single buffered']
    #allocation9 [shape = 's32[1]{0}', space=sflag, size = 0x4, scoped, tag = 'scoped memory for tpu_custom_call.1']
    #allocation10 [shape = 'u8[4096]{0}', space=vmem, size = 0x1000, scoped, tag = 'output window, operand 0, single buffered']
    #allocation11 [shape = 'u8[8192]{0}', space=vmem, size = 0x2000, scoped, tag = 'output window, operand 1, single buffered']
    #allocation12 [shape = 's32[1]{0}', space=sflag, size = 0x4, scoped, tag = 'scoped memory for tpu_custom_call.1']
    %14 = vsyncpa [#allocation3], 0
    %15 = vsyncpa [#allocation6], 0
    %16 = vsyncpa [#allocation9], 0
    %17 = vsyncpa [#allocation4], 0
    %18 = vsyncpa [#allocation12], 0
    // Predicated region
    $region2: #{tpu_custom_call.1} parent=1 // pred_check
      _
    $region3: #{tpu_custom_call.1} parent=1 // pred_check_branch
      %20 = sbr.rel (0) target = $region5
    $region4: #{tpu_custom_call.1} parent=1 // pred_region
      %s22 = ssub.s32 256, 256
      %23 = vsyncadd [#allocation3], %s22
      %s24 = sshll.u32 [#allocation2], 4
      %s25 = int_to_ptr.vmem [resolvable:$true] %s24
      %30 = dma.hbm_to_vmem [thread:$0]  %s0, 256, %s25, [#allocation3], 128, 128, 8
    $region5: #{tpu_custom_call.1} parent=1 // pred_fallthru
      _
    // Predicated region
    $region6: #{tpu_custom_call.1} parent=1 // pred_check
      _
    $region7: #{tpu_custom_call.1} parent=1 // pred_check_branch
      %32 = sbr.rel (0) target = $region9
    $region8: #{tpu_custom_call.1} parent=1 // pred_region
      %s34 = ssub.s32 128, 128
      %35 = vsyncadd [#allocation6], %s34
      %s37 = sshll.u32 [#allocation5], 4
      %s38 = int_to_ptr.vmem [resolvable:$true] %s37
      %40 = dma.hbm_to_vmem [thread:$0]  %s1, 128, %s38, [#allocation6]
    $region9: #{tpu_custom_call.1} parent=1 // pred_fallthru
      _
    // Predicated region
    $region10: #{tpu_custom_call.1} parent=1 // pred_check
      _
    $region11: #{tpu_custom_call.1} parent=1 // pred_check_branch
      %42 = sbr.rel (0) target = $region13
    $region12: #{tpu_custom_call.1} parent=1 // pred_region
      %s44 = ssub.s32 512, 512
      %45 = vsyncadd [#allocation6], %s44
      %s46 = sshll.u32 [#allocation7], 4
      %s47 = int_to_ptr.vmem [resolvable:$true] %s46
      %52 = dma.hbm_to_vmem [thread:$0]  %s2, 512, %s47, [#allocation6], 128, 128, 8
    $region13: #{tpu_custom_call.1} parent=1 // pred_fallthru
      _
    // Predicated region
    $region14: #{tpu_custom_call.1} parent=1 // pred_check
      _
    $region15: #{tpu_custom_call.1} parent=1 // pred_check_branch
      %54 = sbr.rel (0) target = $region17
    $region16: #{tpu_custom_call.1} parent=1 // pred_region
      _
    $region17: #{tpu_custom_call.1} parent=1 // pred_fallthru
      _
    // Predicated region
    $region18: #{tpu_custom_call.1} parent=1 // pred_check
      _
    $region19: #{tpu_custom_call.1} parent=1 // pred_check_branch
      %56 = sbr.rel (0) target = $region21
    $region20: #{tpu_custom_call.1} parent=1 // pred_region
      _
    $region21: #{tpu_custom_call.1} parent=1 // pred_fallthru
      _
    // Predicated region
    $region22: #{tpu_custom_call.1} parent=1 // pred_check
      _
    $region23: #{tpu_custom_call.1} parent=1 // pred_check_branch
      %58 = sbr.rel (0) target = $region25
    $region24: #{tpu_custom_call.1} parent=1 // pred_region
      %s60 = ssub.s32 512, 512
      %61 = vsyncadd [#allocation9], %s60
      %s62 = sshll.u32 [#allocation8], 4
      %s63 = int_to_ptr.vmem [resolvable:$true] %s62
      %68 = dma.hbm_to_vmem [thread:$0]  %s5, 512, %s63, [#allocation9], 128, 128, 8
    $region25: #{tpu_custom_call.1} parent=1 // pred_fallthru
      _
    // Predicated region
    $region26: #{tpu_custom_call.1} parent=1 // pred_check
      _
    $region27: #{tpu_custom_call.1} parent=1 // pred_check_branch
      %70 = sbr.rel (0) target = $region29
    $region28: #{tpu_custom_call.1} parent=1 // pred_region
      _
    $region29: #{tpu_custom_call.1} parent=1 // pred_fallthru
      _
    // Predicated region
    $region30: #{tpu_custom_call.1} parent=1 // pred_check
      _
    $region31: #{tpu_custom_call.1} parent=1 // pred_check_branch
      %72 = sbr.rel (0) target = $region33
    $region32: #{tpu_custom_call.1} parent=1 // pred_region
      %73 = dma.done [#allocation3], 256
    $region33: #{tpu_custom_call.1} parent=1 // pred_fallthru
      _
    // Predicated region
    $region34: #{tpu_custom_call.1} parent=1 // pred_check
      _
    $region35: #{tpu_custom_call.1} parent=1 // pred_check_branch
      %75 = sbr.rel (0) target = $region37
    $region36: #{tpu_custom_call.1} parent=1 // pred_region
      %76 = dma.done [#allocation6], 128
    $region37: #{tpu_custom_call.1} parent=1 // pred_fallthru
      _
    // Predicated region
    $region38: #{tpu_custom_call.1} parent=1 // pred_check
      _
    $region39: #{tpu_custom_call.1} parent=1 // pred_check_branch
      %78 = sbr.rel (0) target = $region41
    $region40: #{tpu_custom_call.1} parent=1 // pred_region
      %79 = dma.done [#allocation6], 512
    $region41: #{tpu_custom_call.1} parent=1 // pred_fallthru
      _
    // Predicated region
    $region42: #{tpu_custom_call.1} parent=1 // pred_check
      _
    $region43: #{tpu_custom_call.1} parent=1 // pred_check_branch
      %81 = sbr.rel (0) target = $region45
    $region44: #{tpu_custom_call.1} parent=1 // pred_region
      %82 = dma.done [#allocation9], 512
    $region45: #{tpu_custom_call.1} parent=1 // pred_fallthru
      _
    %v83 = vld [vmem:[#allocation2] sm:$0xff]
    %v84 = vld [vmem:[#allocation2 + $0x8] sm:$0xff]
    %v85 = vld [vmem:[#allocation5] sm:$0xff]
    %v86 = vadd.f32 %v83, %v85
    %v87 = vadd.f32 %v84, %v85
    %v88 = vld [vmem:[#allocation7] sm:$0xff]
    %v89 = vld [vmem:[#allocation7 + $0x8] sm:$0xff]
    %v90 = vld [vmem:[#allocation7 + $0x10] sm:$0xff]
    %v91 = vld [vmem:[#allocation7 + $0x18] sm:$0xff]
    %v92 = vld [vmem:[%s3] sm:$0x1]
    %v94 = vlaneseq
    %v95 = vshrl.u32 %v94, 7
    %v96 = vsub.s32 0, %v95
    %v97 = vrot.slane %v92, %v96
    %vm99 = vcmask 261120
    %v101 = vsel %vm99, %v86, 0
    %v104 = vsel %vm99, %v87, 0
    %106 = vmatprep.subr.mxu0 0.0
    %107 = vmatpush1.msra.mxu0 %v88
    %108 = vmatprep.subr.mxu0 0.0
    %109 = vmatpush1.msra.mxu0 %v89
    %110 = vmatprep.subr.mxu0 0.0
    %111 = vmatpush1.msra.mxu0 %v90
    %112 = vmatprep.subr.mxu0 0.0
    %113 = vmatpush1.msra.mxu0 %v91
    %114 = vmatprep.subr.mxu0 0.0
    %115 = vmatpush1.msra.mxu0 0.0
    %116 = vmatprep.subr.mxu0 0.0
    %117 = vmatpush1.msra.mxu0 0.0
    %118 = vmatprep.subr.mxu0 0.0
    %119 = vmatpush1.msra.mxu0 0.0
    %120 = vmatprep.subr.mxu0 0.0
    %121 = vmatpush1.msra.mxu0 0.0
    %122 = vmatprep.subr.mxu0 0.0
    %123 = vmatpush1.msra.mxu0 0.0
    %124 = vmatprep.subr.mxu0 0.0
    %125 = vmatpush1.msra.mxu0 0.0
    %126 = vmatprep.subr.mxu0 0.0
    %127 = vmatpush1.msra.mxu0 0.0
    %128 = vmatprep.subr.mxu0 0.0
    %129 = vmatpush1.msra.mxu0 0.0
    %130 = vmatprep.subr.mxu0 0.0
    %131 = vmatpush1.msra.mxu0 0.0
    %132 = vmatprep.subr.mxu0 0.0
    %133 = vmatpush1.msra.mxu0 0.0
    %134 = vmatprep.subr.mxu0 0.0
    %135 = vmatpush1.msra.mxu0 0.0
    %136 = vmatprep.subr.mxu0 0.0
    %137 = vmatpush1.msra.mxu0 0.0
    %138 = vmatprep.subr.mxu0 0.0
    %139 = vmatpush1.msra.mxu0 0.0
    %140 = vmatprep.subr.mxu0 0.0
    %141 = vmatpush1.msra.mxu0 0.0
    %142 = vmatprep.subr.mxu0 0.0
    %143 = vmatpush1.msra.mxu0 0.0
    %144 = vmatprep.subr.mxu0 0.0
    %145 = vmatpush1.msra.mxu0 0.0
    %146 = vmatprep.subr.mxu0 0.0
    %147 = vmatpush1.msra.mxu0 0.0
    %148 = vmatprep.subr.mxu0 0.0
    %149 = vmatpush1.msra.mxu0 0.0
    %150 = vmatprep.subr.mxu0 0.0
    %151 = vmatpush1.msra.mxu0 0.0
    %152 = vmatprep.subr.mxu0 0.0
    %153 = vmatpush1.msra.mxu0 0.0
    %154 = vmatprep.subr.mxu0 0.0
    %155 = vmatpush1.msra.mxu0 0.0
    %156 = vmatprep.subr.mxu0 0.0
    %157 = vmatpush1.msra.mxu0 0.0
    %158 = vmatprep.subr.mxu0 0.0
    %159 = vmatpush1.msra.mxu0 0.0
    %160 = vmatprep.subr.mxu0 0.0
    %161 = vmatpush1.msra.mxu0 0.0
    %162 = vmatprep.subr.mxu0 0.0
    %163 = vmatpush1.msra.mxu0 0.0
    %164 = vmatprep.subr.mxu0 0.0
    %165 = vmatpush1.msra.mxu0 0.0
    %166 = vmatprep.subr.mxu0 0.0
    %167 = vmatpush1.msra.mxu0 0.0
    %168 = vmatprep.subr.mxu0 0.0
    %169 = vmatpush1.msra.mxu0 0.0
    %170 = vmatprep.mubr.f32.mxu0 0.0
    %171 = vmatmul.mubr.f32.gmra.mrb[0].mxu0 %v101
    %v172 = vpop.f32.mrb[0].mxu0
    %v173 = vadd.f32 %v97, %v172
    %v174 = vpop.f32.mrb[0].mxu0
    %175 = vmatprep.mubr.f32.mxu0 0.0
    %176 = vmatmul.mubr.f32.gmra.mrb[0].mxu0 %v104
    %v177 = vpop.f32.mrb[0].mxu0
    %v178 = vadd.f32 %v97, %v177
    %v179 = vpop.f32.mrb[0].mxu0
    %180 = vdwg.mxu0
    %vm181 = vcmask 523520
    %v182 = vsel %vm181, %v173, -inf
    %v183 = vrot.slane %v182, 4
    %v184 = vmax.f32 %v182, %v183
    %v185 = vrot.slane %v184, 2
    %v186 = vmax.f32 %v184, %v185
    %v187 = vrot.slane %v186, 1
    %v188 = vmax.f32 %v186, %v187
    %v189 = vsel %vm181, %v178, -inf
    %v190 = vrot.slane %v189, 4
    %v191 = vmax.f32 %v189, %v190
    %v192 = vrot.slane %v191, 2
    %v193 = vmax.f32 %v191, %v192
    %v194 = vrot.slane %v193, 1
    %v195 = vmax.f32 %v193, %v194
    %v196 = vsub.f32 %v173, %v188
    %v197 = vsub.f32 %v178, %v195
    %v198 = vmul.f32 %v196, 1.442695
    %v199 = vpow.pop %v198
    %v200 = vmul.f32 %v197, 1.442695
    %v201 = vpow.pop %v200
    %v202 = vsel %vm181, %v199, 0.0
    %v203 = vrot.slane %v202, 4
    %v204 = vadd.f32 %v202, %v203
    %v205 = vrot.slane %v204, 2
    %v206 = vadd.f32 %v204, %v205
    %v207 = vrot.slane %v206, 1
    %v208 = vadd.f32 %v206, %v207
    %v209 = vsel %vm181, %v201, 0.0
    %v210 = vrot.slane %v209, 4
    %v211 = vadd.f32 %v209, %v210
    %v212 = vrot.slane %v211, 2
    %v213 = vadd.f32 %v211, %v212
    %v214 = vrot.slane %v213, 1
    %v215 = vadd.f32 %v213, %v214
    %v216 = vrcp.pop %v208
    %v217 = vrcp.pop %v215
    %v218 = vmul.f32 %v199, %v216
    %v219 = vmul.f32 %v201, %v217
    %222 = vrot.lane.b32.xlu0 %v218, 96
    %v223 = vpop.permute.xlu0 %222
    %224 = vrot.lane.b32.xlu0 %v219, 96
    %v225 = vpop.permute.xlu0 %224
    %228 = vst.msk [vmem:[#allocation11] sm:$0xff] %vm99, %v223
    %229 = vst.msk [vmem:[#allocation11 + $0x8] sm:$0xff] %vm99, %v225
    %230 = vxpose.xlu0.b32.start [1/16] %v223, 128
    %231 = vxpose.xlu0.b32.cont [2/16] 0.0, 128
    %232 = vxpose.xlu0.b32.cont [3/16] 0.0, 128
    %233 = vxpose.xlu0.b32.cont [4/16] 0.0, 128
    %234 = vxpose.xlu0.b32.cont [5/16] 0.0, 128
    %235 = vxpose.xlu0.b32.cont [6/16] 0.0, 128
    %236 = vxpose.xlu0.b32.cont [7/16] 0.0, 128
    %237 = vxpose.xlu0.b32.cont [8/16] 0.0, 128
    %238 = vxpose.xlu0.b32.cont [9/16] 0.0, 128
    %239 = vxpose.xlu0.b32.cont [10/16] 0.0, 128
    %240 = vxpose.xlu0.b32.cont [11/16] 0.0, 128
    %241 = vxpose.xlu0.b32.cont [12/16] 0.0, 128
    %242 = vxpose.xlu0.b32.cont [13/16] 0.0, 128
    %243 = vxpose.xlu0.b32.cont [14/16] 0.0, 128
    %244 = vxpose.xlu0.b32.cont [15/16] 0.0, 128
    %245 = vxpose.xlu0.b32.end [16/16] 0.0, 128
    %v246 = vpop.trf.xlu0
    %v247 = vpop.trf.xlu0
    %v248 = vpop.trf.xlu0
    %v249 = vpop.trf.xlu0
    %v250 = vpop.trf.xlu0
    %v251 = vpop.trf.xlu0
    %v252 = vpop.trf.xlu0
    %v253 = vpop.trf.xlu0
    %v254 = vpop.trf.xlu0
    %v255 = vpop.trf.xlu0
    %v256 = vpop.trf.xlu0
    %v257 = vpop.trf.xlu0
    %v258 = vpop.trf.xlu0
    %v259 = vpop.trf.xlu0
    %v260 = vpop.trf.xlu0
    %v261 = vpop.trf.xlu0
    %262 = vxpose.xlu0.b32.start [1/16] %v225, 128
    %263 = vxpose.xlu0.b32.cont [2/16] 0.0, 128
    %264 = vxpose.xlu0.b32.cont [3/16] 0.0, 128
    %265 = vxpose.xlu0.b32.cont [4/16] 0.0, 128
    %266 = vxpose.xlu0.b32.cont [5/16] 0.0, 128
    %267 = vxpose.xlu0.b32.cont [6/16] 0.0, 128
    %268 = vxpose.xlu0.b32.cont [7/16] 0.0, 128
    %269 = vxpose.xlu0.b32.cont [8/16] 0.0, 128
    %270 = vxpose.xlu0.b32.cont [9/16] 0.0, 128
    %271 = vxpose.xlu0.b32.cont [10/16] 0.0, 128
    %272 = vxpose.xlu0.b32.cont [11/16] 0.0, 128
    %273 = vxpose.xlu0.b32.cont [12/16] 0.0, 128
    %274 = vxpose.xlu0.b32.cont [13/16] 0.0, 128
    %275 = vxpose.xlu0.b32.cont [14/16] 0.0, 128
    %276 = vxpose.xlu0.b32.cont [15/16] 0.0, 128
    %277 = vxpose.xlu0.b32.end [16/16] 0.0, 128
    %v278 = vpop.trf.xlu0
    %v279 = vpop.trf.xlu0
    %v280 = vpop.trf.xlu0
    %v281 = vpop.trf.xlu0
    %v282 = vpop.trf.xlu0
    %v283 = vpop.trf.xlu0
    %v284 = vpop.trf.xlu0
    %v285 = vpop.trf.xlu0
    %v286 = vpop.trf.xlu0
    %v287 = vpop.trf.xlu0
    %v288 = vpop.trf.xlu0
    %v289 = vpop.trf.xlu0
    %v290 = vpop.trf.xlu0
    %v291 = vpop.trf.xlu0
    %v292 = vpop.trf.xlu0
    %v293 = vpop.trf.xlu0
    %vm294 = vcmask 64512
    %v296 = vsel %vm294, %v246, 0
    %v299 = vsel %vm294, %v247, 0
    %v302 = vsel %vm294, %v248, 0
    %v305 = vsel %vm294, %v249, 0
    %307 = vmatprep.subr.mxu0 0.0
    %308 = vmatpush1.msra.mxu0 %v173
    %309 = vmatprep.subr.mxu0 0.0
    %310 = vmatpush1.msra.mxu0 0.0
    %311 = vmatprep.subr.mxu0 0.0
    %312 = vmatpush1.msra.mxu0 0.0
    %313 = vmatprep.subr.mxu0 0.0
    %314 = vmatpush1.msra.mxu0 0.0
    %315 = vmatprep.subr.mxu0 0.0
    %316 = vmatpush1.msra.mxu0 0.0
    %317 = vmatprep.subr.mxu0 0.0
    %318 = vmatpush1.msra.mxu0 0.0
    %319 = vmatprep.subr.mxu0 0.0
    %320 = vmatpush1.msra.mxu0 0.0
    %321 = vmatprep.subr.mxu0 0.0
    %322 = vmatpush1.msra.mxu0 0.0
    %323 = vmatprep.subr.mxu0 0.0
    %324 = vmatpush1.msra.mxu0 0.0
    %325 = vmatprep.subr.mxu0 0.0
    %326 = vmatpush1.msra.mxu0 0.0
    %327 = vmatprep.subr.mxu0 0.0
    %328 = vmatpush1.msra.mxu0 0.0
    %329 = vmatprep.subr.mxu0 0.0
    %330 = vmatpush1.msra.mxu0 0.0
    %331 = vmatprep.subr.mxu0 0.0
    %332 = vmatpush1.msra.mxu0 0.0
    %333 = vmatprep.subr.mxu0 0.0
    %334 = vmatpush1.msra.mxu0 0.0
    %335 = vmatprep.subr.mxu0 0.0
    %336 = vmatpush1.msra.mxu0 0.0
    %337 = vmatprep.subr.mxu0 0.0
    %338 = vmatpush1.msra.mxu0 0.0
    %339 = vmatprep.subr.mxu0 0.0
    %340 = vmatpush1.msra.mxu0 0.0
    %341 = vmatprep.subr.mxu0 0.0
    %342 = vmatpush1.msra.mxu0 0.0
    %343 = vmatprep.subr.mxu0 0.0
    %344 = vmatpush1.msra.mxu0 0.0
    %345 = vmatprep.subr.mxu0 0.0
    %346 = vmatpush1.msra.mxu0 0.0
    %347 = vmatprep.subr.mxu0 0.0
    %348 = vmatpush1.msra.mxu0 0.0
    %349 = vmatprep.subr.mxu0 0.0
    %350 = vmatpush1.msra.mxu0 0.0
    %351 = vmatprep.subr.mxu0 0.0
    %352 = vmatpush1.msra.mxu0 0.0
    %353 = vmatprep.subr.mxu0 0.0
    %354 = vmatpush1.msra.mxu0 0.0
    %355 = vmatprep.subr.mxu0 0.0
    %356 = vmatpush1.msra.mxu0 0.0
    %357 = vmatprep.subr.mxu0 0.0
    %358 = vmatpush1.msra.mxu0 0.0
    %359 = vmatprep.subr.mxu0 0.0
    %360 = vmatpush1.msra.mxu0 0.0
    %361 = vmatprep.subr.mxu0 0.0
    %362 = vmatpush1.msra.mxu0 0.0
    %363 = vmatprep.subr.mxu0 0.0
    %364 = vmatpush1.msra.mxu0 0.0
    %365 = vmatprep.subr.mxu0 0.0
    %366 = vmatpush1.msra.mxu0 0.0
    %367 = vmatprep.subr.mxu0 0.0
    %368 = vmatpush1.msra.mxu0 0.0
    %369 = vmatprep.subr.mxu0 0.0
    %370 = vmatpush1.msra.mxu0 0.0
    %371 = vmatprep.mubr.f32.mxu0 0.0
    %372 = vmatmul.mubr.f32.gmra.mrb[0].mxu0 %v296
    %v373 = vpop.f32.mrb[0].mxu0
    %v374 = vadd.f32 0.0, %v373
    %v375 = vpop.f32.mrb[0].mxu0
    %376 = vmatprep.mubr.f32.mxu0 0.0
    %377 = vmatmul.mubr.f32.gmra.mrb[0].mxu0 %v299
    %v378 = vpop.f32.mrb[0].mxu0
    %v379 = vadd.f32 0.0, %v378
    %v380 = vpop.f32.mrb[0].mxu0
    %381 = vmatprep.mubr.f32.mxu0 0.0
    %382 = vmatmul.mubr.f32.gmra.mrb[0].mxu0 %v302
    %v383 = vpop.f32.mrb[0].mxu0
    %v384 = vadd.f32 0.0, %v383
    %v385 = vpop.f32.mrb[0].mxu0
    %386 = vmatprep.mubr.f32.mxu0 0.0
    %387 = vmatmul.mubr.f32.gmra.mrb[0].mxu0 %v305
    %v388 = vpop.f32.mrb[0].mxu0
    %v389 = vadd.f32 0.0, %v388
    %v390 = vpop.f32.mrb[0].mxu0
    %391 = vdwg.mxu0
    %v393 = vsel %vm294, %v278, 0
    %v396 = vsel %vm294, %v279, 0
    %v399 = vsel %vm294, %v280, 0
    %v402 = vsel %vm294, %v281, 0
    %404 = vmatprep.subr.mxu0 0.0
    %405 = vmatpush1.msra.mxu0 %v178
    %406 = vmatprep.subr.mxu0 0.0
    %407 = vmatpush1.msra.mxu0 0.0
    %408 = vmatprep.subr.mxu0 0.0
    %409 = vmatpush1.msra.mxu0 0.0
    %410 = vmatprep.subr.mxu0 0.0
    %411 = vmatpush1.msra.mxu0 0.0
    %412 = vmatprep.subr.mxu0 0.0
    %413 = vmatpush1.msra.mxu0 0.0
    %414 = vmatprep.subr.mxu0 0.0
    %415 = vmatpush1.msra.mxu0 0.0
    %416 = vmatprep.subr.mxu0 0.0
    %417 = vmatpush1.msra.mxu0 0.0
    %418 = vmatprep.subr.mxu0 0.0
    %419 = vmatpush1.msra.mxu0 0.0
    %420 = vmatprep.subr.mxu0 0.0
    %421 = vmatpush1.msra.mxu0 0.0
    %422 = vmatprep.subr.mxu0 0.0
    %423 = vmatpush1.msra.mxu0 0.0
    %424 = vmatprep.subr.mxu0 0.0
    %425 = vmatpush1.msra.mxu0 0.0
    %426 = vmatprep.subr.mxu0 0.0
    %427 = vmatpush1.msra.mxu0 0.0
    %428 = vmatprep.subr.mxu0 0.0
    %429 = vmatpush1.msra.mxu0 0.0
    %430 = vmatprep.subr.mxu0 0.0
    %431 = vmatpush1.msra.mxu0 0.0
    %432 = vmatprep.subr.mxu0 0.0
    %433 = vmatpush1.msra.mxu0 0.0
    %434 = vmatprep.subr.mxu0 0.0
    %435 = vmatpush1.msra.mxu0 0.0
    %436 = vmatprep.subr.mxu0 0.0
    %437 = vmatpush1.msra.mxu0 0.0
    %438 = vmatprep.subr.mxu0 0.0
    %439 = vmatpush1.msra.mxu0 0.0
    %440 = vmatprep.subr.mxu0 0.0
    %441 = vmatpush1.msra.mxu0 0.0
    %442 = vmatprep.subr.mxu0 0.0
    %443 = vmatpush1.msra.mxu0 0.0
    %444 = vmatprep.subr.mxu0 0.0
    %445 = vmatpush1.msra.mxu0 0.0
    %446 = vmatprep.subr.mxu0 0.0
    %447 = vmatpush1.msra.mxu0 0.0
    %448 = vmatprep.subr.mxu0 0.0
    %449 = vmatpush1.msra.mxu0 0.0
    %450 = vmatprep.subr.mxu0 0.0
    %451 = vmatpush1.msra.mxu0 0.0
    %452 = vmatprep.subr.mxu0 0.0
    %453 = vmatpush1.msra.mxu0 0.0
    %454 = vmatprep.subr.mxu0 0.0
    %455 = vmatpush1.msra.mxu0 0.0
    %456 = vmatprep.subr.mxu0 0.0
    %457 = vmatpush1.msra.mxu0 0.0
    %458 = vmatprep.subr.mxu0 0.0
    %459 = vmatpush1.msra.mxu0 0.0
    %460 = vmatprep.subr.mxu0 0.0
    %461 = vmatpush1.msra.mxu0 0.0
    %462 = vmatprep.subr.mxu0 0.0
    %463 = vmatpush1.msra.mxu0 0.0
    %464 = vmatprep.subr.mxu0 0.0
    %465 = vmatpush1.msra.mxu0 0.0
    %466 = vmatprep.subr.mxu0 0.0
    %467 = vmatpush1.msra.mxu0 0.0
    %468 = vmatprep.mubr.f32.mxu0 0.0
    %469 = vmatmul.mubr.f32.gmra.mrb[0].mxu0 %v393
    %v470 = vpop.f32.mrb[0].mxu0
    %v471 = vadd.f32 0.0, %v470
    %v472 = vpop.f32.mrb[0].mxu0
    %473 = vmatprep.mubr.f32.mxu0 0.0
    %474 = vmatmul.mubr.f32.gmra.mrb[0].mxu0 %v396
    %v475 = vpop.f32.mrb[0].mxu0
    %v476 = vadd.f32 0.0, %v475
    %v477 = vpop.f32.mrb[0].mxu0
    %478 = vmatprep.mubr.f32.mxu0 0.0
    %479 = vmatmul.mubr.f32.gmra.mrb[0].mxu0 %v399
    %v480 = vpop.f32.mrb[0].mxu0
    %v481 = vadd.f32 0.0, %v480
    %v482 = vpop.f32.mrb[0].mxu0
    %483 = vmatprep.mubr.f32.mxu0 0.0
    %484 = vmatmul.mubr.f32.gmra.mrb[0].mxu0 %v402
    %v485 = vpop.f32.mrb[0].mxu0
    %v486 = vadd.f32 0.0, %v485
    %v487 = vpop.f32.mrb[0].mxu0
    %488 = vdwg.mxu0
    %v497 = vcombine.high %v374, %v374
    %v498 = vcombine.high %v379, %v379
    %v499 = vcombine.high %v384, %v384
    %v500 = vcombine.high %v389, %v389
    %v501 = vcombine.high %v471, %v471
    %v502 = vcombine.high %v476, %v476
    %v503 = vcombine.high %v481, %v481
    %v504 = vcombine.high %v486, %v486
    %v513 = vld [vmem:[%s4] sm:$0x1]
    %v514 = vld [vmem:[%s4 + $0x1] sm:$0x1]
    %v515 = vld [vmem:[%s4 + $0x2] sm:$0x1]
    %v516 = vld [vmem:[%s4 + $0x3] sm:$0x1]
    %v517 = vld [vmem:[%s4 + $0x4] sm:$0x1]
    %v518 = vld [vmem:[%s4 + $0x5] sm:$0x1]
    %v519 = vld [vmem:[%s4 + $0x6] sm:$0x1]
    %v520 = vld [vmem:[%s4 + $0x7] sm:$0x1]
    %v529 = vlaneseq
    %v530 = vshrl.u32 %v529, 7
    %v531 = vsub.s32 0, %v530
    %v532 = vrot.slane %v513, %v531
    %v533 = vlaneseq
    %v534 = vshrl.u32 %v533, 7
    %v535 = vsub.s32 0, %v534
    %v536 = vrot.slane %v514, %v535
    %v537 = vlaneseq
    %v538 = vshrl.u32 %v537, 7
    %v539 = vsub.s32 0, %v538
    %v540 = vrot.slane %v515, %v539
    %v541 = vlaneseq
    %v542 = vshrl.u32 %v541, 7
    %v543 = vsub.s32 0, %v542
    %v544 = vrot.slane %v516, %v543
    %v545 = vlaneseq
    %v546 = vshrl.u32 %v545, 7
    %v547 = vsub.s32 0, %v546
    %v548 = vrot.slane %v517, %v547
    %v549 = vlaneseq
    %v550 = vshrl.u32 %v549, 7
    %v551 = vsub.s32 0, %v550
    %v552 = vrot.slane %v518, %v551
    %v553 = vlaneseq
    %v554 = vshrl.u32 %v553, 7
    %v555 = vsub.s32 0, %v554
    %v556 = vrot.slane %v519, %v555
    %v557 = vlaneseq
    %v558 = vshrl.u32 %v557, 7
    %v559 = vsub.s32 0, %v558
    %v560 = vrot.slane %v520, %v559
    %v569 = vmul.f32 %v374, %v532
    %v570 = vmul.f32 %v497, %v536
    %v571 = vmul.f32 %v379, %v540
    %v572 = vmul.f32 %v498, %v544
    %v573 = vmul.f32 %v384, %v548
    %v574 = vmul.f32 %v499, %v552
    %v575 = vmul.f32 %v389, %v556
    %v576 = vmul.f32 %v500, %v560
    %v577 = vmul.f32 %v471, %v532
    %v578 = vmul.f32 %v501, %v536
    %v579 = vmul.f32 %v476, %v540
    %v580 = vmul.f32 %v502, %v544
    %v581 = vmul.f32 %v481, %v548
    %v582 = vmul.f32 %v503, %v552
    %v583 = vmul.f32 %v486, %v556
    %v584 = vmul.f32 %v504, %v560
    %vm585 = vcmask 257024
    %v586 = vsel %vm585, %v569, 0.0
    %v587 = vsel %vm585, %v570, 0.0
    %v588 = vadd.f32 %v586, %v587
    %v589 = vsel %vm585, %v571, 0.0
    %v590 = vadd.f32 %v588, %v589
    %v591 = vsel %vm585, %v572, 0.0
    %v592 = vadd.f32 %v590, %v591
    %v593 = vsel %vm585, %v573, 0.0
    %v594 = vadd.f32 %v592, %v593
    %v595 = vsel %vm585, %v574, 0.0
    %v596 = vadd.f32 %v594, %v595
    %v597 = vsel %vm585, %v575, 0.0
    %v598 = vadd.f32 %v596, %v597
    %v599 = vsel %vm585, %v576, 0.0
    %v600 = vadd.f32 %v598, %v599
    %v601 = vsel %vm585, %v577, 0.0
    %v602 = vsel %vm585, %v578, 0.0
    %v603 = vadd.f32 %v601, %v602
    %v604 = vsel %vm585, %v579, 0.0
    %v605 = vadd.f32 %v603, %v604
    %v606 = vsel %vm585, %v580, 0.0
    %v607 = vadd.f32 %v605, %v606
    %v608 = vsel %vm585, %v581, 0.0
    %v609 = vadd.f32 %v607, %v608
    %v610 = vsel %vm585, %v582, 0.0
    %v611 = vadd.f32 %v609, %v610
    %v612 = vsel %vm585, %v583, 0.0
    %v613 = vadd.f32 %v611, %v612
    %v614 = vsel %vm585, %v584, 0.0
    %v615 = vadd.f32 %v613, %v614
    %v616 = vld [vmem:[#allocation8] sm:$0xff]
    %v617 = vld [vmem:[#allocation8 + $0x8] sm:$0xff]
    %v618 = vld [vmem:[#allocation8 + $0x10] sm:$0xff]
    %v619 = vld [vmem:[#allocation8 + $0x18] sm:$0xff]
    %v620 = vld [vmem:[%s6] sm:$0x1]
    %v622 = vlaneseq
    %v623 = vshrl.u32 %v622, 7
    %v624 = vsub.s32 0, %v623
    %v625 = vrot.slane %v620, %v624
    %v629 = vcombine.low %v600, %v615
    %v630 = vsel %vm99, %v629, 0
    %632 = vmatprep.subr.mxu0 0.0
    %633 = vmatpush1.msra.mxu0 %v616
    %634 = vmatprep.subr.mxu0 0.0
    %635 = vmatpush1.msra.mxu0 %v617
    %636 = vmatprep.subr.mxu0 0.0
    %637 = vmatpush1.msra.mxu0 %v618
    %638 = vmatprep.subr.mxu0 0.0
    %639 = vmatpush1.msra.mxu0 %v619
    %640 = vmatprep.subr.mxu0 0.0
    %641 = vmatpush1.msra.mxu0 0.0
    %642 = vmatprep.subr.mxu0 0.0
    %643 = vmatpush1.msra.mxu0 0.0
    %644 = vmatprep.subr.mxu0 0.0
    %645 = vmatpush1.msra.mxu0 0.0
    %646 = vmatprep.subr.mxu0 0.0
    %647 = vmatpush1.msra.mxu0 0.0
    %648 = vmatprep.subr.mxu0 0.0
    %649 = vmatpush1.msra.mxu0 0.0
    %650 = vmatprep.subr.mxu0 0.0
    %651 = vmatpush1.msra.mxu0 0.0
    %652 = vmatprep.subr.mxu0 0.0
    %653 = vmatpush1.msra.mxu0 0.0
    %654 = vmatprep.subr.mxu0 0.0
    %655 = vmatpush1.msra.mxu0 0.0
    %656 = vmatprep.subr.mxu0 0.0
    %657 = vmatpush1.msra.mxu0 0.0
    %658 = vmatprep.subr.mxu0 0.0
    %659 = vmatpush1.msra.mxu0 0.0
    %660 = vmatprep.subr.mxu0 0.0
    %661 = vmatpush1.msra.mxu0 0.0
    %662 = vmatprep.subr.mxu0 0.0
    %663 = vmatpush1.msra.mxu0 0.0
    %664 = vmatprep.subr.mxu0 0.0
    %665 = vmatpush1.msra.mxu0 0.0
    %666 = vmatprep.subr.mxu0 0.0
    %667 = vmatpush1.msra.mxu0 0.0
    %668 = vmatprep.subr.mxu0 0.0
    %669 = vmatpush1.msra.mxu0 0.0
    %670 = vmatprep.subr.mxu0 0.0
    %671 = vmatpush1.msra.mxu0 0.0
    %672 = vmatprep.subr.mxu0 0.0
    %673 = vmatpush1.msra.mxu0 0.0
    %674 = vmatprep.subr.mxu0 0.0
    %675 = vmatpush1.msra.mxu0 0.0
    %676 = vmatprep.subr.mxu0 0.0
    %677 = vmatpush1.msra.mxu0 0.0
    %678 = vmatprep.subr.mxu0 0.0
    %679 = vmatpush1.msra.mxu0 0.0
    %680 = vmatprep.subr.mxu0 0.0
    %681 = vmatpush1.msra.mxu0 0.0
    %682 = vmatprep.subr.mxu0 0.0
    %683 = vmatpush1.msra.mxu0 0.0
    %684 = vmatprep.subr.mxu0 0.0
    %685 = vmatpush1.msra.mxu0 0.0
    %686 = vmatprep.subr.mxu0 0.0
    %687 = vmatpush1.msra.mxu0 0.0
    %688 = vmatprep.subr.mxu0 0.0
    %689 = vmatpush1.msra.mxu0 0.0
    %690 = vmatprep.subr.mxu0 0.0
    %691 = vmatpush1.msra.mxu0 0.0
    %692 = vmatprep.subr.mxu0 0.0
    %693 = vmatpush1.msra.mxu0 0.0
    %694 = vmatprep.subr.mxu0 0.0
    %695 = vmatpush1.msra.mxu0 0.0
    %696 = vmatprep.mubr.f32.mxu0 0.0
    %697 = vmatmul.mubr.f32.gmra.mrb[0].mxu0 %v630
    %v698 = vpop.f32.mrb[0].mxu0
    %v699 = vadd.f32 %v625, %v698
    %v700 = vpop.f32.mrb[0].mxu0
    %701 = vdwg.mxu0
    %v703 = vcombine.high %v699, %v699
    %705 = vst.msk [vmem:[#allocation10] sm:$0xf] %vm585, %v699
    %706 = vst.msk [vmem:[#allocation10 + $0x4] sm:$0xf] %vm585, %v703
    // Predicated region
    $region46: #{tpu_custom_call.1} parent=1 // pred_check
      _
    $region47: #{tpu_custom_call.1} parent=1 // pred_check_branch
      %708 = sbr.rel (0) target = $region49
    $region48: #{tpu_custom_call.1} parent=1 // pred_region
      %s710 = ssub.s32 128, 128
      %711 = vsyncadd [#allocation4], %s710
      %s712 = sshll.u32 [#allocation10], 4
      %s713 = int_to_ptr.vmem [resolvable:$true] %s712
      %718 = dma.vmem_to_hbm [thread:$0]  %s713, 128, %s7, [#allocation4], 64, 64, 4
    $region49: #{tpu_custom_call.1} parent=1 // pred_fallthru
      _
    // Predicated region
    $region50: #{tpu_custom_call.1} parent=1 // pred_check
      _
    $region51: #{tpu_custom_call.1} parent=1 // pred_check_branch
      %720 = sbr.rel (0) target = $region53
    $region52: #{tpu_custom_call.1} parent=1 // pred_region
      %s722 = ssub.s32 256, 256
      %723 = vsyncadd [#allocation12], %s722
      %s724 = sshll.u32 [#allocation11], 4
      %s725 = int_to_ptr.vmem [resolvable:$true] %s724
      %730 = dma.vmem_to_hbm [thread:$0]  %s725, 256, %s8, [#allocation12], 128, 128, 8
    $region53: #{tpu_custom_call.1} parent=1 // pred_fallthru
      _
    // Predicated region
    $region54: #{tpu_custom_call.1} parent=1 // pred_check
      _
    $region55: #{tpu_custom_call.1} parent=1 // pred_check_branch
      %732 = sbr.rel (0) target = $region57
    $region56: #{tpu_custom_call.1} parent=1 // pred_region
      %733 = dma.done [#allocation4], 128
    $region57: #{tpu_custom_call.1} parent=1 // pred_fallthru
      _
    // Predicated region
    $region58: #{tpu_custom_call.1} parent=1 // pred_check
      _
    $region59: #{tpu_custom_call.1} parent=1 // pred_check_branch
      %735 = sbr.rel (0) target = $region61
    $region60: #{tpu_custom_call.1} parent=1 // pred_region
      %736 = dma.done [#allocation12], 256
    $region61: #{tpu_custom_call.1} parent=1 // pred_fallthru
      _
    %737 = vsyncpa [#allocation3], 1
    %738 = vsyncpa [#allocation6], 1
    %739 = vsyncpa [#allocation9], 1
    %740 = vsyncpa [#allocation4], 1
    %741 = vsyncpa [#allocation12], 1

</llo_original>
